<compile_context>
chip_gen: v6e
topology: v6e:2x2x1
jax: 0.10.0
libtpu: 0.0.40
codegen_flags: <defaults>
</compile_context>

<pallas_src>
import functools

import jax
import jax.numpy as jnp
from jax.experimental import pallas as pl
from jax.experimental.pallas import tpu as pltpu


def _round_up(x, m):
    return (x + m - 1) // m * m


def bigram_kernel(pair_ref, table_ref, *out_refs, vocab_size, n_rows,
                  emit_logits, emit_loss):
    i = pl.program_id(0)
    pair = pair_ref[...]                 # (tile, 2) int32: [:,0]=idx, [:,1]=target
    table = table_ref[...]               # (Vp, Vp) f32, Vp = 128-padded vocab
    tb = pair.shape[0]
    vp = table.shape[1]

    idx = pair[:, 0:1]                   # (tile, 1)
    cols = jax.lax.broadcasted_iota(jnp.int32, (tb, vp), 1)

    # Embedding row gather as one-hot @ table on the MXU (K = N = 128).  Exact:
    # each output element is a single 1.0 * table entry.
    onehot = (cols == idx).astype(jnp.float32)
    logits = jnp.dot(onehot, table, preferred_element_type=jnp.float32)

    o = 0
    if emit_logits:
        out_refs[o][...] = logits        # (tile, Vp) lane-dense store
        o += 1

    if emit_loss:
        tgt = pair[:, 1:2]               # (tile, 1)
        # Numerically stable log-softmax, excluding padded vocab columns.
        neg = jnp.float32(-1e30)
        masked = jnp.where(cols < vocab_size, logits, neg)
        m = jnp.max(masked, axis=-1, keepdims=True)
        lse = m + jnp.log(jnp.sum(jnp.exp(masked - m), axis=-1, keepdims=True))
        tgt_logit = jnp.sum(jnp.where(cols == tgt, logits, 0.0),
                            axis=-1, keepdims=True)
        per_row = lse - tgt_logit        # (tile, 1)
        # Mask padded rows of the last tile, reduce to one partial sum per tile,
        # store it as a full (8, 128) vreg block (no narrow masked vst).
        rows = i * tb + jax.lax.broadcasted_iota(jnp.int32, (tb, 1), 0)
        tile_sum = jnp.sum(jnp.where(rows < n_rows, per_row, 0.0))
        out_refs[o][...] = jnp.broadcast_to(tile_sum, out_refs[o].shape)


def bigram_forward(idx, targets, table, *, tile_bt=4096, return_logits=True):
    """Forward pass of BigramLanguageModel.

    idx, targets: (B, T) int token ids; table: (V, V) float32 embedding weights.

    Matches the PyTorch module:
      targets is None                     -> (logits (B, T, V), None)
      targets given                       -> (logits (B*T, V), scalar loss)
      targets given, return_logits=False  -> (None, scalar loss)  # fast path
    """
    B, T = idx.shape
    V = table.shape[0]
    BT = B * T
    Vp = _round_up(V, 128)

    has_targets = targets is not None
    emit_loss = has_targets
    emit_logits = return_logits or not has_targets

    # Row tiling: multiple of 8, as large as requested, but capped at ~half the
    # rows so there are >= 2 grid steps for megacore ("parallel") on v7x.
    rows8 = max(8, _round_up(BT, 8))
    tile = _round_up(min(tile_bt, rows8), 8)
    if rows8 >= 16:
        tile = min(tile, _round_up((rows8 + 1) // 2, 8))
    BT_pad = _round_up(BT, tile)
    num_tiles = BT_pad // tile

    # Pack idx and targets into one (BT_pad, 2) int32 input -> one small DMA per
    # step instead of two.  Padded rows keep id 0 and are masked out of the loss.
    tgt_flat = (jnp.asarray(targets).reshape(-1).astype(jnp.int32)
                if has_targets else jnp.zeros((BT,), jnp.int32))
    pairs = jnp.zeros((BT_pad, 2), jnp.int32)
    pairs = pairs.at[:BT, 0].set(jnp.asarray(idx).reshape(-1).astype(jnp.int32))
    pairs = pairs.at[:BT, 1].set(tgt_flat)

    # Pad vocab to a lane-dense multiple of 128; padded rows are never gathered
    # and padded columns are masked out of the softmax inside the kernel.
    table_p = jnp.zeros((Vp, Vp), jnp.float32).at[:V, :V].set(
        table.astype(jnp.float32))

    o_shapes, o_specs = [], []
    if emit_logits:
        o_shapes.append(jax.ShapeDtypeStruct((BT_pad, Vp), jnp.float32))
        o_specs.append(pl.BlockSpec((tile, Vp), lambda i: (i, 0)))
    if emit_loss:
        o_shapes.append(jax.ShapeDtypeStruct((num_tiles, 8, 128), jnp.float32))
        o_specs.append(pl.BlockSpec((1, 8, 128), lambda i: (i, 0, 0)))

    # VMEM budget from the actual (double-buffered) block sizes + headroom,
    # capped at v7x's 64 MiB per-core VMEM.
    vmem_bytes = (
        2 * tile * 2 * 4                        # packed idx/target blocks
        + 2 * Vp * Vp * 4                       # table (constant index)
        + (2 * tile * Vp * 4 if emit_logits else 0)
        + (2 * 8 * 128 * 4 if emit_loss else 0)
    )
    vmem_limit = min(max(2 * vmem_bytes, 6 * 1024 * 1024), 64 * 1024 * 1024)

    kernel = functools.partial(bigram_kernel, vocab_size=V, n_rows=BT,
                               emit_logits=emit_logits, emit_loss=emit_loss)

    outs = pl.pallas_call(
        kernel,
        grid=(num_tiles,),
        in_specs=[
            pl.BlockSpec((tile, 2), lambda i: (i, 0)),   # packed idx/targets
            pl.BlockSpec((Vp, Vp), lambda i: (0, 0)),    # table (VMEM-resident)
        ],
        out_specs=tuple(o_specs),
        out_shape=tuple(o_shapes),
        compiler_params=pltpu.CompilerParams(
            dimension_semantics=("parallel",),
            vmem_limit_bytes=vmem_limit,
        ),
    )(pairs, table_p)

    o = 0
    logits = None
    if emit_logits:
        logits_p = outs[o]
        o += 1
        # Slice off row/vocab padding to match the PyTorch return exactly.
        # (Separate XLA copy; use return_logits=False when only loss is needed.)
        flat = logits_p[:BT, :V]
        logits = flat if has_targets else flat.reshape(B, T, V)
    loss = None
    if emit_loss:
        loss_tiles = outs[o]
        o += 1
        loss = jnp.sum(loss_tiles[:, 0, 0]) / jnp.float32(BT)
    return logits, loss


if __name__ == "__main__":
    # Small shapes consistent with the module: char-level vocab, short sequences.
    vocab_size = 65       # e.g. Shakespeare char vocab
    B, T = 2, 8

    key = jax.random.PRNGKey(0)
    k_tab, k_idx, k_tgt = jax.random.split(key, 3)

    # nn.Embedding default init: N(0, 1) weights of shape (vocab_size, vocab_size).
    table = jax.random.normal(k_tab, (vocab_size, vocab_size), dtype=jnp.float32)
    idx = jax.random.randint(k_idx, (B, T), 0, vocab_size, dtype=jnp.int32)
    targets = jax.random.randint(k_tgt, (B, T), 0, vocab_size, dtype=jnp.int32)

    # Pure-JAX reference of the PyTorch semantics.
    ref_logits = table[idx]                                  # (B, T, V)
    ref_flat = ref_logits.reshape(B * T, vocab_size)
    ref_lse = jax.scipy.special.logsumexp(ref_flat, axis=-1)
    ref_loss = jnp.mean(ref_lse - ref_flat[jnp.arange(B * T),
                                           targets.reshape(-1)])

    # 1) Full forward with targets: (B*T, V) logits + scalar loss.
    logits, loss = bigram_forward(idx, targets, table)
    jax.block_until_ready((logits, loss))
    assert logits.shape == (B * T, vocab_size)
    assert jnp.allclose(logits, ref_flat, atol=1e-5)
    assert jnp.allclose(loss, ref_loss, atol=1e-5)

    # 2) Loss-only fast path (training step): logits never leave VMEM.
    no_logits, loss_only = bigram_forward(idx, targets, table,
                                          return_logits=False)
    jax.block_until_ready(loss_only)
    assert no_logits is None
    assert jnp.allclose(loss_only, ref_loss, atol=1e-5)

    # 3) targets=None (inference): (B, T, V) logits, loss is None.
    logits_inf, loss_none = bigram_forward(idx, None, table)
    jax.block_until_ready(logits_inf)
    assert loss_none is None
    assert logits_inf.shape == (B, T, vocab_size)
    assert jnp.allclose(logits_inf, ref_logits, atol=1e-5)

    print("KERNEL_OK")
</pallas_src>

<mosaic_0001>
module attributes {stable_mosaic.version = 11 : i64} {
  func.func @bigram_kernel(%arg0: i32, %arg1: memref<8x2xi32, #tpu.memory_space<vmem>>, %arg2: memref<128x128xf32, #tpu.memory_space<vmem>>, %arg3: memref<8x128xf32, #tpu.memory_space<vmem>>, %arg4: memref<1x8x128xf32, #tpu.memory_space<vmem>>) attributes {dimension_semantics = [#tpu.dimension_semantics<parallel>], iteration_bounds = array<i64: 2>, scalar_prefetch = 0 : i64, scratch_operands = 0 : i64, tpu.core_type = #tpu.core_type<tc>, window_params = [{transform_indices = @transform_0, window_bounds = array<i64: 8, 2>}, {pipeline_mode = #tpu.pipeline_mode<synchronous>, transform_indices = @transform_1, window_bounds = array<i64: 128, 128>}, {transform_indices = @transform_2, window_bounds = array<i64: 8, 128>}, {transform_indices = @transform_3, window_bounds = array<i64: 1, 8, 128>}]} {
    %c0 = arith.constant 0 : index
    %c0_0 = arith.constant 0 : index
    %0 = vector.load %arg1[%c0, %c0_0] : memref<8x2xi32, #tpu.memory_space<vmem>>, vector<8x2xi32>
    %c0_1 = arith.constant 0 : index
    %c0_2 = arith.constant 0 : index
    %1 = vector.load %arg2[%c0_1, %c0_2] : memref<128x128xf32, #tpu.memory_space<vmem>>, vector<128x128xf32>
    %2 = vector.extract_strided_slice %0 {offsets = [0, 0], sizes = [8, 1], strides = [1, 1]} : vector<8x2xi32> to vector<8x1xi32>
    %3 = tpu.iota {dimensions = array<i32: 1>} : vector<8x128xi32>
    %4 = vector.broadcast %2 : vector<8x1xi32> to vector<8x128xi32>
    %5 = arith.cmpi eq, %3, %4 : vector<8x128xi32>
    %6 = arith.extui %5 : vector<8x128xi1> to vector<8x128xi32>
    %7 = arith.sitofp %6 : vector<8x128xi32> to vector<8x128xf32>
    %cst = arith.constant dense<0.000000e+00> : vector<8x128xf32>
    %8 = tpu.matmul %7, %1, %cst {dimension_numbers = #tpu.dot_dimension_numbers<[1], [0], [0], [1], [0, 0, 1, 1], [], []>} : vector<8x128xf32>, vector<128x128xf32>, vector<8x128xf32> -> vector<8x128xf32>
    %c0_3 = arith.constant 0 : index
    %c0_4 = arith.constant 0 : index
    %9 = vector.load %arg3[%c0_3, %c0_4] : memref<8x128xf32, #tpu.memory_space<vmem>>, vector<8x128xf32>
    tpu.vector_store %arg3[%c0_3, %c0_4], %8 {strides = array<i32>} : memref<8x128xf32, #tpu.memory_space<vmem>>, vector<8x128xf32>,
    %10 = vector.extract_strided_slice %0 {offsets = [0, 1], sizes = [8, 1], strides = [1, 1]} : vector<8x2xi32> to vector<8x1xi32>
    %c65_i32 = arith.constant 65 : i32
    %11 = vector.broadcast %c65_i32 : i32 to vector<8x128xi32>
    %12 = arith.cmpi slt, %3, %11 : vector<8x128xi32>
    %cst_5 = arith.constant -1.000000e+30 : f32
    %13 = vector.broadcast %cst_5 : f32 to vector<8x128xf32>
    %14 = arith.select %12, %8, %13 : vector<8x128xi1>, vector<8x128xf32>
    %cst_6 = arith.constant dense<0xFF800000> : vector<8xf32>
    %15 = vector.multi_reduction <maximumf>, %14, %cst_6 [1] : vector<8x128xf32> to vector<8xf32>
    %16 = vector.shape_cast %15 : vector<8xf32> to vector<8x1xf32>
    %17 = vector.broadcast %16 : vector<8x1xf32> to vector<8x128xf32>
    %18 = arith.subf %14, %17 : vector<8x128xf32>
    %19 = math.exp %18 : vector<8x128xf32>
    %cst_7 = arith.constant dense<0.000000e+00> : vector<8xf32>
    %20 = vector.multi_reduction <add>, %19, %cst_7 [1] : vector<8x128xf32> to vector<8xf32>
    %21 = vector.shape_cast %20 : vector<8xf32> to vector<8x1xf32>
    %22 = math.log %21 : vector<8x1xf32>
    %23 = arith.addf %16, %22 : vector<8x1xf32>
    %24 = vector.broadcast %10 : vector<8x1xi32> to vector<8x128xi32>
    %25 = arith.cmpi eq, %3, %24 : vector<8x128xi32>
    %cst_8 = arith.constant 0.000000e+00 : f32
    %26 = vector.broadcast %cst_8 : f32 to vector<8x128xf32>
    %27 = arith.select %25, %8, %26 : vector<8x128xi1>, vector<8x128xf32>
    %cst_9 = arith.constant dense<0.000000e+00> : vector<8xf32>
    %28 = vector.multi_reduction <add>, %27, %cst_9 [1] : vector<8x128xf32> to vector<8xf32>
    %29 = vector.shape_cast %28 : vector<8xf32> to vector<8x1xf32>
    %30 = arith.subf %23, %29 : vector<8x1xf32>
    %c8_i32 = arith.constant 8 : i32
    %31 = arith.muli %arg0, %c8_i32 : i32
    %32 = tpu.iota {dimensions = array<i32: 0>} : vector<8x1xi32>
    %33 = vector.broadcast %31 : i32 to vector<8x1xi32>
    %34 = arith.addi %33, %32 : vector<8x1xi32>
    %c16_i32 = arith.constant 16 : i32
    %35 = vector.broadcast %c16_i32 : i32 to vector<8x1xi32>
    %36 = arith.cmpi slt, %34, %35 : vector<8x1xi32>
    %cst_10 = arith.constant 0.000000e+00 : f32
    %37 = vector.broadcast %cst_10 : f32 to vector<8x1xf32>
    %38 = arith.select %36, %30, %37 : vector<8x1xi1>, vector<8x1xf32>
    %39 = vector.shape_cast %38 : vector<8x1xf32> to vector<1x8x1xf32>
    %cst_11 = arith.constant dense<0.000000e+00> : vector<1xf32>
    %40 = vector.multi_reduction <add>, %39, %cst_11 [1, 2] : vector<1x8x1xf32> to vector<1xf32>
    %41 = vector.shape_cast %40 : vector<1xf32> to vector<1x1x1xf32>
    %42 = vector.extract %41[0, 0, 0] : f32 from vector<1x1x1xf32>
    %43 = vector.broadcast %42 : f32 to vector<1x8x128xf32>
    %c0_12 = arith.constant 0 : index
    %c0_13 = arith.constant 0 : index
    %c0_14 = arith.constant 0 : index
    %44 = vector.load %arg4[%c0_12, %c0_13, %c0_14] : memref<1x8x128xf32, #tpu.memory_space<vmem>>, vector<1x8x128xf32>
    tpu.vector_store %arg4[%c0_12, %c0_13, %c0_14], %43 {strides = array<i32>} : memref<1x8x128xf32, #tpu.memory_space<vmem>>, vector<1x8x128xf32>,
    return
  }
  func.func @transform_0(%arg0: i32) -> (i32, i32) {
    %c0_i32 = arith.constant 0 : i32
    %c0_i32_0 = arith.constant 0 : i32
    return %arg0, %c0_i32 : i32, i32
  }
  func.func @transform_1(%arg0: i32) -> (i32, i32) {
    %c0_i32 = arith.constant 0 : i32
    %c0_i32_0 = arith.constant 0 : i32
    %c0_i32_1 = arith.constant 0 : i32
    return %c0_i32, %c0_i32_0 : i32, i32
  }
  func.func @transform_2(%arg0: i32) -> (i32, i32) {
    %c0_i32 = arith.constant 0 : i32
    %c0_i32_0 = arith.constant 0 : i32
    return %arg0, %c0_i32 : i32, i32
  }
  func.func @transform_3(%arg0: i32) -> (i32, i32, i32) {
    %c0_i32 = arith.constant 0 : i32
    %c0_i32_0 = arith.constant 0 : i32
    %c0_i32_1 = arith.constant 0 : i32
    return %arg0, %c0_i32, %c0_i32_0 : i32, i32, i32
  }
}

</mosaic_0001>

<llo_original>
// kernel: tpu_custom_call.1
$region0: #{tpu_custom_call.1}
  #allocation0 [shape = 'u32[]', space=smem, size = 0x4, offset = 0x4, fixed_abs, tag = 'smem constant byte address 0x4 - core index']
  #allocation1 [shape = 'u32[144,128]{1,0:T(1,128)}', space=vmem, size = 0x12000, scoped, tag = 'internal scratch']
  %s0 = inlined_call_operand.vmem [shape: s32[16,2], index: 0, kind: input, shape index: {}]
  %s1 = inlined_call_operand.hbm [shape: f32[128,128], index: 1, kind: input, shape index: {}]
  %s2 = inlined_call_operand.hbm [shape: f32[16,128], index: 2, kind: output, shape index: {0}]
  %s3 = inlined_call_operand.hbm [shape: f32[2,8,128], index: 3, kind: output, shape index: {1}]
  %4 = xla_tuple %s2, %s3
  %s5 = sld [smem:[#allocation0]]
  $region53: #{tpu_custom_call.1} parent=0
    _
  %s7 = ssub.s32 1, %s5
  %s8 = scalar_select 0, %s7, %s5
  $region1: #{tpu_custom_call.1} parent=0
    #allocation2 [shape = 'u8[65536]{0}', space=vmem, size = 0x10000, scoped, tag = 'input window, operand 1, single buffered']
    #allocation3 [shape = 's32[2]{0}', space=sflag, size = 0x8, scoped, tag = 'scoped memory for tpu_custom_call.1']
    #allocation4 [shape = 's32[2]{0}', space=sflag, size = 0x8, scoped, tag = 'scoped memory for tpu_custom_call.1']
    #allocation5 [shape = 'u8[8192]{0}', space=vmem, size = 0x2000, scoped, tag = 'output window, operand 0']
    #allocation6 [shape = 'u8[8192]{0}', space=vmem, size = 0x2000, scoped, tag = 'output window, operand 1']
    #allocation7 [shape = 's32[2]{0}', space=sflag, size = 0x8, scoped, tag = 'scoped memory for tpu_custom_call.1']
    %9 = vsyncpa [#allocation3], 0
    %10 = vsyncpa [#allocation4], 0
    %s11 = scalar_lea.sflag [#allocation4], 1
    %12 = vsyncpa %s11, 0
    %13 = vsyncpa [#allocation7], 0
    %s14 = scalar_lea.sflag [#allocation7], 1
    %15 = vsyncpa %s14, 0
    loop: start=0, step=1, limit=4
    $region2: #{tpu_custom_call.1} parent=1 // loop_pre_header
      _
    $region3: #{tpu_custom_call.1} parent=1 // loop_header
      %s17 = sphi 0, %s21
      %p18 = scmp.ge.s32.totalorder %s17, 4
      %s27 = sphi 0, %s29
      %s30 = sphi 0, %s27
      %s31 = sphi 0, %s30
      %s47 = sphi 0, %s31
      %s51 = sphi 0, %s51
      %s53 = sphi 0, %s51
      %s54 = sphi 0, %s53
      %s68 = sphi 0, %s54
      %s74 = sphi 0, %s76
      %s77 = sphi 0, %s74
      %s78 = sphi 0, %s77
      %s94 = sphi 0, %s78
      %s100 = sphi 0, %s102
      %s103 = sphi 0, %s100
      %s104 = sphi 0, %s103
      %s120 = sphi 0, %s104
    $region4: #{tpu_custom_call.1} parent=1 // loop_header_branch
      %20 = sbr.rel (%p18) target = $region8
    $region5: #{tpu_custom_call.1} parent=1 // loop_body
      %s22 = ssub.s32 %s17, 1
      %s23 = ssub.s32 %s17, 2
      %s24 = sadd.s32 %s17, 1
      %s25 = ssub.s32 %s17, %s24
      %p26 = scmp.eq.s32.totalorder %s25, 0
      %s28 = sadd.s32 %s27, 1
      %s29 = scalar_select %p26, %s27, %s28
      %p32 = pneg %p26
      %p33 = scmp.eq.s32.totalorder %s17, 1
      %p34 = por %p32, %p33
      %p35 = scmp.ne.s32.totalorder %s27, %s30
      %p36 = scmp.eq.s32.totalorder %s17, 0
      %p37 = por %p35, %p36
      %p38 = scmp.ne.s32.totalorder %s27, %s30
      %p39 = scmp.eq.s32.totalorder %s22, 1
      %p40 = por %p38, %p39
      %p41 = scmp.ne.s32.totalorder %s30, %s31
      %p42 = scmp.eq.s32.totalorder %s22, 0
      %p43 = por %p41, %p42
      %p44 = scmp.ne.s32.totalorder %s30, %s31
      %p45 = scmp.eq.s32.totalorder %s23, 1
      %p46 = por %p44, %p45
      %p48 = scmp.ne.s32.totalorder %s31, %s47
      %p49 = scmp.eq.s32.totalorder %s23, 0
      %p50 = por %p48, %p49
      %s52 = sadd.s32 %s51, 1
      %p55 = scmp.eq.s32.totalorder %s17, 1
      %p56 = scmp.ne.s32.totalorder %s51, %s53
      %p57 = scmp.eq.s32.totalorder %s17, 0
      %p58 = por %p56, %p57
      %p59 = scmp.ne.s32.totalorder %s51, %s53
      %p60 = scmp.eq.s32.totalorder %s22, 1
      %p61 = por %p59, %p60
      %p62 = scmp.ne.s32.totalorder %s53, %s54
      %p63 = scmp.eq.s32.totalorder %s22, 0
      %p64 = por %p62, %p63
      %p65 = scmp.ne.s32.totalorder %s53, %s54
      %p66 = scmp.eq.s32.totalorder %s23, 1
      %p67 = por %p65, %p66
      %p69 = scmp.ne.s32.totalorder %s54, %s68
      %p70 = scmp.eq.s32.totalorder %s23, 0
      %p71 = por %p69, %p70
      %s72 = ssub.s32 %s17, %s24
      %p73 = scmp.eq.s32.totalorder %s72, 0
      %s75 = sadd.s32 %s74, 1
      %s76 = scalar_select %p73, %s74, %s75
      %p79 = pneg %p73
      %p80 = scmp.eq.s32.totalorder %s17, 1
      %p81 = por %p79, %p80
      %p82 = scmp.ne.s32.totalorder %s74, %s77
      %p83 = scmp.eq.s32.totalorder %s17, 0
      %p84 = por %p82, %p83
      %p85 = scmp.ne.s32.totalorder %s74, %s77
      %p86 = scmp.eq.s32.totalorder %s22, 1
      %p87 = por %p85, %p86
      %p88 = scmp.ne.s32.totalorder %s77, %s78
      %p89 = scmp.eq.s32.totalorder %s22, 0
      %p90 = por %p88, %p89
      %p91 = scmp.ne.s32.totalorder %s77, %s78
      %p92 = scmp.eq.s32.totalorder %s23, 1
      %p93 = por %p91, %p92
      %p95 = scmp.ne.s32.totalorder %s78, %s94
      %p96 = scmp.eq.s32.totalorder %s23, 0
      %p97 = por %p95, %p96
      %s98 = ssub.s32 %s17, %s24
      %p99 = scmp.eq.s32.totalorder %s98, 0
      %s101 = sadd.s32 %s100, 1
      %s102 = scalar_select %p99, %s100, %s101
      %p105 = pneg %p99
      %p106 = scmp.eq.s32.totalorder %s17, 1
      %p107 = por %p105, %p106
      %p108 = scmp.ne.s32.totalorder %s100, %s103
      %p109 = scmp.eq.s32.totalorder %s17, 0
      %p110 = por %p108, %p109
      %p111 = scmp.ne.s32.totalorder %s100, %s103
      %p112 = scmp.eq.s32.totalorder %s22, 1
      %p113 = por %p111, %p112
      %p114 = scmp.ne.s32.totalorder %s103, %s104
      %p115 = scmp.eq.s32.totalorder %s22, 0
      %p116 = por %p114, %p115
      %p117 = scmp.ne.s32.totalorder %s103, %s104
      %p118 = scmp.eq.s32.totalorder %s23, 1
      %p119 = por %p117, %p118
      %p121 = scmp.ne.s32.totalorder %s104, %s120
      %p122 = scmp.eq.s32.totalorder %s23, 0
      %p123 = por %p121, %p122
      %p124 = scmp.le.s32.totalorder 1, %s17
      %p125 = scmp.lt.s32.totalorder %s17, 3
      %p126 = pnand %p124, %p125
      %p127 = pneg %p126
      // Predicated region
      $region9: #{tpu_custom_call.1} parent=5 // pred_check
        _
      $region10: #{tpu_custom_call.1} parent=5 // pred_check_branch
        %129 = sbr.rel (%p126) target = $region12
      $region11: #{tpu_custom_call.1} parent=5 // pred_region
        %s130 = ssub.s32 %s17, 1
        // Predicated region
        $region13: #{tpu_custom_call.1} parent=11 // pred_check
          %p131 = pneg %p64
        $region14: #{tpu_custom_call.1} parent=11 // pred_check_branch
          %133 = sbr.rel (%p131) target = $region16
        $region15: #{tpu_custom_call.1} parent=11 // pred_region
          %s135 = ssub.s32 2048, 2048
          %136 = vsyncadd [#allocation3], %s135
          %s137 = sshll.u32 [#allocation2], 4
          %s138 = int_to_ptr.vmem [resolvable:$true] %s137
          %143 = dma.hbm_to_vmem [thread:$0]  %s1, 2048, %s138, [#allocation3], 128, 128, 8
        $region16: #{tpu_custom_call.1} parent=11 // pred_fallthru
          _
      $region12: #{tpu_custom_call.1} parent=5 // pred_fallthru
        _
      %p144 = scmp.lt.s32.totalorder %s17, 2
      // Predicated region
      $region17: #{tpu_custom_call.1} parent=5 // pred_check
        %p145 = pneg %p144
      $region18: #{tpu_custom_call.1} parent=5 // pred_check_branch
        %147 = sbr.rel (%p145) target = $region20
      $region19: #{tpu_custom_call.1} parent=5 // pred_region
        // Predicated region
        $region21: #{tpu_custom_call.1} parent=19 // pred_check
          %p148 = pneg %p37
        $region22: #{tpu_custom_call.1} parent=19 // pred_check_branch
          %150 = sbr.rel (%p148) target = $region24
        $region23: #{tpu_custom_call.1} parent=19 // pred_region
          %p151 = scmp.lt.s32.totalorder %s17, 1
          %s152 = scalar_select %p151, %s17, 1
          %s153 = smul.addr %s152, 8
          %s154 = scalar_lea.vmem %s0, %s153
        $region24: #{tpu_custom_call.1} parent=19 // pred_fallthru
          _
      $region20: #{tpu_custom_call.1} parent=5 // pred_fallthru
        _
      %p155 = scmp.le.s32.totalorder 1, %s17
      %p156 = scmp.lt.s32.totalorder %s17, 3
      %p157 = pnand %p155, %p156
      %p158 = pneg %p157
      // Predicated region
      $region25: #{tpu_custom_call.1} parent=5 // pred_check
        _
      $region26: #{tpu_custom_call.1} parent=5 // pred_check_branch
        %160 = sbr.rel (%p157) target = $region28
      $region27: #{tpu_custom_call.1} parent=5 // pred_region
        %s161 = ssub.s32 %s17, 1
        // Predicated region
        $region29: #{tpu_custom_call.1} parent=27 // pred_check
          %p162 = pneg %p64
        $region30: #{tpu_custom_call.1} parent=27 // pred_check_branch
          %164 = sbr.rel (%p162) target = $region32
        $region31: #{tpu_custom_call.1} parent=27 // pred_region
          %165 = dma.done [#allocation3], 2048
        $region32: #{tpu_custom_call.1} parent=27 // pred_fallthru
          _
        %p166 = scmp.lt.s32.totalorder %s22, 1
        %s167 = scalar_select %p166, %s22, 1
        %s168 = smul.addr %s167, 8
        %s169 = scalar_lea.vmem %s0, %s168
        %p170 = pneg %p43
        %p171 = pneg %p40
        %p172 = pneg %p64
        %p173 = pneg %p61
        %p174 = pneg %p90
        %p175 = pneg %p87
        %s176 = sand.u32 %s77, 1
        %s177 = scalar_lea.sflag [#allocation4], %s176
        %s178 = sand.u32 %s77, 1
        %s179 = smul.addr %s178, 8
        %s180 = scalar_lea.vmem [#allocation5], %s179
        %p181 = pneg %p116
        %p182 = pneg %p113
        %s183 = sand.u32 %s103, 1
        %s184 = scalar_lea.sflag [#allocation7], %s183
        %s185 = sand.u32 %s103, 1
        %s186 = smul.addr %s185, 8
        %s187 = scalar_lea.vmem [#allocation6], %s186
        %p188 = scmp.lt.s32.totalorder %s22, 1
        %s189 = scalar_select %p188, %s22, 1
        %s190 = smul.addr %s189, 8
        %s191 = scalar_lea.vmem %s0, %s190
        %v192 = vld [vmem:[%s191] sm:$0xff]
        %v193 = vld [vmem:[#allocation2] sm:$0xff]
        %v194 = vld [vmem:[#allocation2 + $0x8] sm:$0xff]
        %v195 = vld [vmem:[#allocation2 + $0x10] sm:$0xff]
        %v196 = vld [vmem:[#allocation2 + $0x18] sm:$0xff]
        %v197 = vld [vmem:[#allocation2 + $0x20] sm:$0xff]
        %v198 = vld [vmem:[#allocation2 + $0x28] sm:$0xff]
        %v199 = vld [vmem:[#allocation2 + $0x30] sm:$0xff]
        %v200 = vld [vmem:[#allocation2 + $0x38] sm:$0xff]
        %v201 = vld [vmem:[#allocation2 + $0x40] sm:$0xff]
        %v202 = vld [vmem:[#allocation2 + $0x48] sm:$0xff]
        %v203 = vld [vmem:[#allocation2 + $0x50] sm:$0xff]
        %v204 = vld [vmem:[#allocation2 + $0x58] sm:$0xff]
        %v205 = vld [vmem:[#allocation2 + $0x60] sm:$0xff]
        %v206 = vld [vmem:[#allocation2 + $0x68] sm:$0xff]
        %v207 = vld [vmem:[#allocation2 + $0x70] sm:$0xff]
        %v208 = vld [vmem:[#allocation2 + $0x78] sm:$0xff]
        %v209 = vlaneseq
        %v210 = vand.u32 %v209, 127
        %211 = vset.pattern.permute.xlu0 0
        %212 = vperm.xlu0 %211, %v192
        %v213 = vpop.permute.xlu0 %212
        %vm214 = vcmp.eq.s32.totalorder %v210, %v213
        %v215 = vsel %vm214, 1, 0
        %v216 = vcvt.s32.f32 %v215
        %217 = vmatprep.subr.mxu0 0.0
        %218 = vmatpush1.msra.mxu0 %v208
        %219 = vmatprep.subr.mxu0 0.0
        %220 = vmatpush1.msra.mxu0 %v207
        %221 = vmatprep.subr.mxu0 0.0
        %222 = vmatpush1.msra.mxu0 %v206
        %223 = vmatprep.subr.mxu0 0.0
        %224 = vmatpush1.msra.mxu0 %v205
        %225 = vmatprep.subr.mxu0 0.0
        %226 = vmatpush1.msra.mxu0 %v204
        %227 = vmatprep.subr.mxu0 0.0
        %228 = vmatpush1.msra.mxu0 %v203
        %229 = vmatprep.subr.mxu0 0.0
        %230 = vmatpush1.msra.mxu0 %v202
        %231 = vmatprep.subr.mxu0 0.0
        %232 = vmatpush1.msra.mxu0 %v201
        %233 = vmatprep.subr.mxu0 0.0
        %234 = vmatpush1.msra.mxu0 %v200
        %235 = vmatprep.subr.mxu0 0.0
        %236 = vmatpush1.msra.mxu0 %v199
        %237 = vmatprep.subr.mxu0 0.0
        %238 = vmatpush1.msra.mxu0 %v198
        %239 = vmatprep.subr.mxu0 0.0
        %240 = vmatpush1.msra.mxu0 %v197
        %241 = vmatprep.subr.mxu0 0.0
        %242 = vmatpush1.msra.mxu0 %v196
        %243 = vmatprep.subr.mxu0 0.0
        %244 = vmatpush1.msra.mxu0 %v195
        %245 = vmatprep.subr.mxu0 0.0
        %246 = vmatpush1.msra.mxu0 %v194
        %247 = vmatprep.subr.mxu0 0.0
        %248 = vmatpush1.msra.mxu0 %v193
        %249 = vmatprep.subr.mxu0 0.0
        %250 = vmatpush2.msra.mxu0 0.0
        %251 = vmatprep.subr.mxu0 0.0
        %252 = vmatpush2.msra.mxu0 0.0
        %253 = vmatprep.subr.mxu0 0.0
        %254 = vmatpush2.msra.mxu0 0.0
        %255 = vmatprep.subr.mxu0 0.0
        %256 = vmatpush2.msra.mxu0 0.0
        %257 = vmatprep.subr.mxu0 0.0
        %258 = vmatpush2.msra.mxu0 0.0
        %259 = vmatprep.subr.mxu0 0.0
        %260 = vmatpush2.msra.mxu0 0.0
        %261 = vmatprep.subr.mxu0 0.0
        %262 = vmatpush2.msra.mxu0 0.0
        %263 = vmatprep.subr.mxu0 0.0
        %264 = vmatpush2.msra.mxu0 0.0
        %265 = vmatprep.subr.mxu0 0.0
        %266 = vmatpush2.msra.mxu0 0.0
        %267 = vmatprep.subr.mxu0 0.0
        %268 = vmatpush2.msra.mxu0 0.0
        %269 = vmatprep.subr.mxu0 0.0
        %270 = vmatpush2.msra.mxu0 0.0
        %271 = vmatprep.subr.mxu0 0.0
        %272 = vmatpush2.msra.mxu0 0.0
        %273 = vmatprep.subr.mxu0 0.0
        %274 = vmatpush2.msra.mxu0 0.0
        %275 = vmatprep.subr.mxu0 0.0
        %276 = vmatpush2.msra.mxu0 0.0
        %277 = vmatprep.subr.mxu0 0.0
        %278 = vmatpush2.msra.mxu0 0.0
        %279 = vmatprep.subr.mxu0 0.0
        %280 = vmatpush2.msra.mxu0 0.0
        %281 = vmatprep.mubr.f32.mxu0 0.0
        %282 = vmatmul.mubr.f32.gmra.mxu0 %v216
        %v283 = vpop.f32.mrf.mxu0
        %v284 = vadd.f32 0.0, %v283
        %v285 = vpop.f32.mrf.mxu0
        %286 = vdwg.mxu0
        %287 = vst [vmem:[%s180] sm:$0xff] %v284
        %vm288 = vcmp.lt.s32.totalorder %v210, 65
        %v289 = vsel %vm288, %v284, -1e+30
        %290 = vmax.xlane.f32.xlu0 %v289
        %v291 = vpop.xlane.xlu0 %290
        %v292 = vsub.f32 %v289, %v291
        %v293 = vmul.f32 %v292, 1.442695
        %v294 = vpow.pop %v293
        %295 = vadd.xlane.f32.xlu0 %v294
        %v296 = vpop.xlane.xlu0 %295
        %v297 = vlog2.pop %v296
        %v298 = vmul.f32 %v297, 0.6931472
        %v299 = vadd.f32 %v291, %v298
        %300 = vset.pattern.permute.xlu0 1
        %301 = vperm.xlu0 %300, %v192
        %v302 = vpop.permute.xlu0 %301
        %vm303 = vcmp.eq.s32.totalorder %v210, %v302
        %v304 = vsel %vm303, %v284, 0.0
        %305 = vadd.xlane.f32.xlu0 %v304
        %v306 = vpop.xlane.xlu0 %305
        %v307 = vsub.f32 %v299, %v306
        %s308 = smul.u32 %s22, 8
        %v309 = vlaneseq
        %v310 = vshrl.u32 %v309, 7
        %v311 = vstv %s308
        %v312 = vadd.s32 %v311, %v310
        %vm313 = vcmp.lt.s32.totalorder %v312, 16
        %v314 = vsel %vm313, %v307, 0.0
        %vm315 = vcmask 7168
        %v316 = vsel %vm315, %v314, 0.0
        %317 = vadd.xlane.f32.xlu0 %v316
        %v318 = vpop.xlane.xlu0 %317
        %v319 = vrot.slane %v318, 4
        %v320 = vadd.f32 %v318, %v319
        %v321 = vrot.slane %v320, 2
        %v322 = vadd.f32 %v320, %v321
        %v323 = vrot.slane %v322, 1
        %v324 = vadd.f32 %v322, %v323
        %s325 = vtos %v324
        %v326 = vstv %s325
        %327 = vst [vmem:[%s187] sm:$0xff] %v326
        %s328 = sand.u32 %s77, 1
        %s329 = scalar_lea.sflag [#allocation4], %s328
        %s330 = sand.u32 %s77, 1
        %s331 = smul.addr %s330, 8
        %s332 = scalar_lea.vmem [#allocation5], %s331
        %s333 = sand.u32 %s103, 1
        %s334 = scalar_lea.sflag [#allocation7], %s333
        %s335 = sand.u32 %s103, 1
        %s336 = smul.addr %s335, 8
        %s337 = scalar_lea.vmem [#allocation6], %s336
        // Predicated region
        $region33: #{tpu_custom_call.1} parent=27 // pred_check
          %p338 = pneg %p87
        $region34: #{tpu_custom_call.1} parent=27 // pred_check_branch
          %340 = sbr.rel (%p338) target = $region36
        $region35: #{tpu_custom_call.1} parent=27 // pred_region
          %s342 = ssub.s32 128, 128
          %343 = vsyncadd %s329, %s342
          %s344 = smul.addr %s22, 128
          %s345 = scalar_lea.hbm %s2, %s344
          %s347 = sshll.u32 %s332, 4
          %s348 = int_to_ptr.vmem [resolvable:$true] %s347
          %350 = dma.vmem_to_hbm [thread:$0]  %s348, 128, %s345, %s329
        $region36: #{tpu_custom_call.1} parent=27 // pred_fallthru
          _
        // Predicated region
        $region37: #{tpu_custom_call.1} parent=27 // pred_check
          %p351 = pneg %p113
        $region38: #{tpu_custom_call.1} parent=27 // pred_check_branch
          %353 = sbr.rel (%p351) target = $region40
        $region39: #{tpu_custom_call.1} parent=27 // pred_region
          %s355 = ssub.s32 128, 128
          %356 = vsyncadd %s334, %s355
          %s357 = smul.addr %s22, 128
          %s358 = scalar_lea.hbm %s3, %s357
          %s360 = sshll.u32 %s337, 4
          %s361 = int_to_ptr.vmem [resolvable:$true] %s360
          %363 = dma.vmem_to_hbm [thread:$0]  %s361, 128, %s358, %s334
        $region40: #{tpu_custom_call.1} parent=27 // pred_fallthru
          _
      $region28: #{tpu_custom_call.1} parent=5 // pred_fallthru
        _
      %p364 = scmp.le.s32.totalorder 2, %s17
      // Predicated region
      $region41: #{tpu_custom_call.1} parent=5 // pred_check
        %p365 = pneg %p364
      $region42: #{tpu_custom_call.1} parent=5 // pred_check_branch
        %367 = sbr.rel (%p365) target = $region44
      $region43: #{tpu_custom_call.1} parent=5 // pred_region
        %s368 = ssub.s32 %s17, 2
        // Predicated region
        $region45: #{tpu_custom_call.1} parent=43 // pred_check
          %p369 = pneg %p93
        $region46: #{tpu_custom_call.1} parent=43 // pred_check_branch
          %371 = sbr.rel (%p369) target = $region48
        $region47: #{tpu_custom_call.1} parent=43 // pred_region
          %s372 = sand.u32 %s78, 1
          %s373 = scalar_lea.sflag [#allocation4], %s372
          %s374 = sand.u32 %s78, 1
          %s375 = smul.addr %s374, 8
          %s376 = scalar_lea.vmem [#allocation5], %s375
          %377 = dma.done %s373, 128
        $region48: #{tpu_custom_call.1} parent=43 // pred_fallthru
          _
        // Predicated region
        $region49: #{tpu_custom_call.1} parent=43 // pred_check
          %p378 = pneg %p119
        $region50: #{tpu_custom_call.1} parent=43 // pred_check_branch
          %380 = sbr.rel (%p378) target = $region52
        $region51: #{tpu_custom_call.1} parent=43 // pred_region
          %s381 = sand.u32 %s104, 1
          %s382 = scalar_lea.sflag [#allocation7], %s381
          %s383 = sand.u32 %s104, 1
          %s384 = smul.addr %s383, 8
          %s385 = scalar_lea.vmem [#allocation6], %s384
          %386 = dma.done %s382, 128
        $region52: #{tpu_custom_call.1} parent=43 // pred_fallthru
          _
      $region44: #{tpu_custom_call.1} parent=5 // pred_fallthru
        _
    $region6: #{tpu_custom_call.1} parent=1 // loop_footer
      %s21 = sadd.s32 1, %s17
    $region7: #{tpu_custom_call.1} parent=1 // loop_footer_branch
      %16 = sbr.rel target = $region3
    $region8: #{tpu_custom_call.1} parent=1 // loop_exit
      _
    %387 = vsyncpa [#allocation3], 1
    %s388 = scalar_lea.sflag [#allocation3], 1
    %389 = vsyncpa %s388, 1
    %390 = vsyncpa [#allocation4], 1
    %s391 = scalar_lea.sflag [#allocation4], 1
    %392 = vsyncpa %s391, 1
    %393 = vsyncpa [#allocation7], 1
    %s394 = scalar_lea.sflag [#allocation7], 1
    %395 = vsyncpa %s394, 1

</llo_original>
